<compile_context>
chip_gen: v7x
topology: tpu7x:2x2x1
jax: 0.10.0
libtpu: 0.0.40
codegen_flags: <defaults>
</compile_context>

<pallas_src>
import jax
import jax.numpy as jnp
from jax.experimental import pallas as pl
from jax.experimental.pallas import tpu as pltpu


# --------------------------------------------------------------------------- #
# Kernel: y = ReLU(x @ W1 + b1) @ W2 + b2 + x     (weights resident in VMEM)
# --------------------------------------------------------------------------- #
def residual_mlp_kernel(x_ref, w1_ref, b1_ref, w2_ref, b2_ref, o_ref):
    x = x_ref[...]                               # (tb, d0) f32 -- also the residual
    w1 = w1_ref[...]                             # (d0, d1p) bf16/f32 (resident)
    w2 = w2_ref[...]                             # (d1p, d2) bf16/f32 (resident)
    b1 = b1_ref[...]                             # (1, d1p) f32
    b2 = b2_ref[...]                             # (1, d2)  f32

    # First Linear: MXU matmul (bf16 in / f32 acc); bias + ReLU on the VPU in f32.
    h = jnp.dot(x.astype(w1.dtype), w1, preferred_element_type=jnp.float32)
    h = jnp.maximum(h + b1, 0.0)

    # Second Linear + bias + residual add (residual path stays in full f32).
    y = jnp.dot(h.astype(w2.dtype), w2, preferred_element_type=jnp.float32)
    o_ref[...] = (y + b2 + x).astype(o_ref.dtype)


# --------------------------------------------------------------------------- #
# Helpers
# --------------------------------------------------------------------------- #
def _round_up(v, m):
    return ((v + m - 1) // m) * m


def _pad_to(a, shape):
    pads = [(0, t - s) for s, t in zip(a.shape, shape)]
    if all(p == (0, 0) for p in pads):
        return a
    return jnp.pad(a, pads)


def _vmem_capacity_bytes():
    try:
        return int(pltpu.get_tpu_info().vmem_capacity_bytes)
    except Exception:
        return 64 * 2**20   # conservative default (v7x per-TensorCore VMEM)


def _build_call(B, d0, d1p, d2, tb, out_dtype, vmem_limit, cost, fast):
    """fast=True: single-buffered weights + output aliased onto x.  fast=False: plain."""

    def const_spec(shape):
        if fast:
            return pl.BlockSpec(shape, lambda i: (0, 0), pipeline_mode=pl.Buffered(1))
        return pl.BlockSpec(shape, lambda i: (0, 0))

    extra = {"input_output_aliases": {0: 0}} if fast else {}

    return pl.pallas_call(
        residual_mlp_kernel,
        out_shape=jax.ShapeDtypeStruct((B, d2), out_dtype),
        grid_spec=pl.GridSpec(
            grid=(pl.cdiv(B, tb),),
            in_specs=[
                pl.BlockSpec((tb, d0), lambda i: (i, 0)),   # x tile (batch tiled)
                const_spec((d0, d1p)),                      # W1 (grid-invariant)
                const_spec((1, d1p)),                       # b1
                const_spec((d1p, d2)),                      # W2 (grid-invariant)
                const_spec((1, d2)),                        # b2
            ],
            out_specs=pl.BlockSpec((tb, d2), lambda i: (i, 0)),
        ),
        compiler_params=pltpu.CompilerParams(
            dimension_semantics=("parallel",),
            vmem_limit_bytes=vmem_limit,
        ),
        cost_estimate=cost,
        **extra,
    )


# --------------------------------------------------------------------------- #
# Wrapper
# --------------------------------------------------------------------------- #
def residual_mlp_pallas(x, w1, b1, w2, b2, *, batch_tile=None, use_bf16=True):
    """Residual(simple_MLP): y = ReLU(x @ w1 + b1) @ w2 + b2 + x.

    x: (B, d0); w1: (d0, d1); b1: (1, d1); w2: (d1, d2); b2: (1, d2); requires d2 == d0.
    Weights are stored pre-transposed (in_features, out_features): identical math to
    PyTorch's `x @ W.T + b`.
    """
    B, d0 = x.shape
    d1 = w1.shape[1]
    d2 = w2.shape[1]
    assert d2 == d0, "Residual requires fn(x) to keep the feature dim of x"

    # Pad only the tiny weights/biases (hidden lanes -> multiple of 128). x / out keep
    # their native feature width: block last dim == full array dim is always legal, so no
    # extra HBM pad/slice passes on the big streamed arrays.
    d1p = _round_up(d1, 128)

    wdtype = jnp.bfloat16 if use_bf16 else x.dtype
    w1_p = _pad_to(w1, (d0, d1p)).astype(wdtype)
    b1_p = _pad_to(b1, (1, d1p)).astype(jnp.float32)
    w2_p = _pad_to(w2, (d1p, d2)).astype(wdtype)
    b2_p = _pad_to(b2, (1, d2)).astype(jnp.float32)

    wbytes = jnp.dtype(wdtype).itemsize
    weight_bytes = (d0 * d1p + d1p * d2) * wbytes + (d1p + d2) * 4
    vmem_cap = _vmem_capacity_bytes()

    # ---- batch tile: as large as the VMEM budget allows, but keep >= ~4 grid steps ----
    if batch_tile is None:
        budget = vmem_cap // 2                               # headroom for compiler temps
        per_row = 2 * d0 * 4 + 2 * d2 * 4 + 2 * d1p * 4      # 2-buf x, 2-buf out, hidden
        tb = (budget - weight_bytes) // per_row
        tb = min(tb, 2048)
        tb = min(tb, _round_up(-(-B // 4), 8))               # >=4 steps: pipeline + megacore
        tb = max(8, (tb // 8) * 8)
    else:
        tb = max(8, _round_up(min(batch_tile, B), 8))
    tb = min(tb, _round_up(B, 8))

    # ---- VMEM limit: actual footprint (with margin), capped at 0.75x physical VMEM ----
    footprint = (2 * tb * d0 * 4 + 2 * tb * d2 * 4           # x / out tiles (2-buffered)
                 + 2 * weight_bytes                          # weights (margin for fallback)
                 + 2 * tb * d1p * 4)                         # f32 hidden intermediates
    vmem_limit = int(min(int(0.75 * vmem_cap), max(32 * 2**20, 2 * footprint)))

    cost = pl.CostEstimate(
        flops=2 * B * (d0 * d1p + d1p * d2),
        transcendentals=0,
        bytes_accessed=B * d0 * 4 + B * d2 * 4 + weight_bytes,
    )

    args = (x, w1_p, b1_p, w2_p, b2_p)
    try:
        return _build_call(B, d0, d1p, d2, tb, x.dtype, vmem_limit, cost, True)(*args)
    except Exception:
        # Conservative fallback: default double-buffered operands, no output aliasing.
        return _build_call(B, d0, d1p, d2, tb, x.dtype, vmem_limit, cost, False)(*args)


# --------------------------------------------------------------------------- #
# Init + reference
# --------------------------------------------------------------------------- #
def init_params(key, dims, dtype=jnp.float32):
    """nn.Linear-style init (weights kept transposed as (in, out))."""
    d0, d1, d2 = dims
    k1, k2, k3, k4 = jax.random.split(key, 4)
    lim1 = 1.0 / jnp.sqrt(d0)
    lim2 = 1.0 / jnp.sqrt(d1)
    w1 = jax.random.uniform(k1, (d0, d1), dtype, -lim1, lim1)
    b1 = jax.random.uniform(k2, (1, d1), dtype, -lim1, lim1)
    w2 = jax.random.uniform(k3, (d1, d2), dtype, -lim2, lim2)
    b2 = jax.random.uniform(k4, (1, d2), dtype, -lim2, lim2)
    return w1, b1, w2, b2


def reference_residual_mlp(x, w1, b1, w2, b2, use_bf16=True):
    """Same math as the kernel (bf16 MXU inputs, f32 accumulation, f32 residual)."""
    wdt = jnp.bfloat16 if use_bf16 else x.dtype
    h = jnp.dot(x.astype(wdt), w1.astype(wdt), preferred_element_type=jnp.float32)
    h = jnp.maximum(h + b1.astype(jnp.float32), 0.0)
    y = jnp.dot(h.astype(wdt), w2.astype(wdt), preferred_element_type=jnp.float32)
    return (y + b2.astype(jnp.float32) + x).astype(x.dtype)


# --------------------------------------------------------------------------- #
if __name__ == "__main__":
    key = jax.random.PRNGKey(0)

    # Lane-aligned path: feature dims multiples of 128; batch tiled -> 4 grid steps.
    D, H, B = 128, 256, 64
    kx, kp = jax.random.split(key)
    x = jax.random.normal(kx, (B, D), jnp.float32)
    w1, b1, w2, b2 = init_params(kp, (D, H, D))
    ref = reference_residual_mlp(x, w1, b1, w2, b2)
    out = jax.block_until_ready(residual_mlp_pallas(x, w1, b1, w2, b2))
    assert out.shape == (B, D)
    assert jnp.allclose(out, ref, atol=2e-2, rtol=2e-2)

    # Unaligned path: only weights/biases padded (hidden -> 128 lanes); x / out keep
    # their native 32-lane width (masked stores instead of extra HBM pad/slice passes).
    D2, H2, B2 = 32, 48, 40
    x2 = jax.random.normal(jax.random.PRNGKey(1), (B2, D2), jnp.float32)
    w1b, b1b, w2b, b2b = init_params(jax.random.PRNGKey(2), (D2, H2, D2))
    ref2 = reference_residual_mlp(x2, w1b, b1b, w2b, b2b)
    out2 = jax.block_until_ready(residual_mlp_pallas(x2, w1b, b1b, w2b, b2b))
    assert out2.shape == (B2, D2)
    assert jnp.allclose(out2, ref2, atol=2e-2, rtol=2e-2)

    print("KERNEL_OK")
</pallas_src>

<mosaic_0001>
module attributes {stable_mosaic.version = 11 : i64} {
  func.func @residual_mlp_kernel(%arg0: i32, %arg1: memref<16x128xf32, #tpu.memory_space<vmem>>, %arg2: memref<128x256xbf16, #tpu.memory_space<vmem>>, %arg3: memref<1x256xf32, #tpu.memory_space<vmem>>, %arg4: memref<256x128xbf16, #tpu.memory_space<vmem>>, %arg5: memref<1x128xf32, #tpu.memory_space<vmem>>, %arg6: memref<16x128xf32, #tpu.memory_space<vmem>>) attributes {dimension_semantics = [#tpu.dimension_semantics<parallel>], iteration_bounds = array<i64: 4>, scalar_prefetch = 0 : i64, scratch_operands = 0 : i64, tpu.core_type = #tpu.core_type<tc>, window_params = [{transform_indices = @transform_0, window_bounds = array<i64: 16, 128>}, {pipeline_mode = #tpu.pipeline_mode<synchronous>, transform_indices = @transform_1, window_bounds = array<i64: 128, 256>}, {pipeline_mode = #tpu.pipeline_mode<synchronous>, transform_indices = @transform_2, window_bounds = array<i64: 1, 256>}, {pipeline_mode = #tpu.pipeline_mode<synchronous>, transform_indices = @transform_3, window_bounds = array<i64: 256, 128>}, {pipeline_mode = #tpu.pipeline_mode<synchronous>, transform_indices = @transform_4, window_bounds = array<i64: 1, 128>}, {transform_indices = @transform_5, window_bounds = array<i64: 16, 128>}]} {
    %c0 = arith.constant 0 : index
    %c0_0 = arith.constant 0 : index
    %0 = vector.load %arg1[%c0, %c0_0] : memref<16x128xf32, #tpu.memory_space<vmem>>, vector<16x128xf32>
    %c0_1 = arith.constant 0 : index
    %c0_2 = arith.constant 0 : index
    %1 = vector.load %arg2[%c0_1, %c0_2] : memref<128x256xbf16, #tpu.memory_space<vmem>>, vector<128x256xbf16>
    %c0_3 = arith.constant 0 : index
    %c0_4 = arith.constant 0 : index
    %2 = vector.load %arg4[%c0_3, %c0_4] : memref<256x128xbf16, #tpu.memory_space<vmem>>, vector<256x128xbf16>
    %c0_5 = arith.constant 0 : index
    %c0_6 = arith.constant 0 : index
    %3 = vector.load %arg3[%c0_5, %c0_6] : memref<1x256xf32, #tpu.memory_space<vmem>>, vector<1x256xf32>
    %c0_7 = arith.constant 0 : index
    %c0_8 = arith.constant 0 : index
    %4 = vector.load %arg5[%c0_7, %c0_8] : memref<1x128xf32, #tpu.memory_space<vmem>>, vector<1x128xf32>
    %5 = arith.truncf %0 : vector<16x128xf32> to vector<16x128xbf16>
    %cst = arith.constant dense<0.000000e+00> : vector<16x256xf32>
    %6 = tpu.matmul %5, %1, %cst {dimension_numbers = #tpu.dot_dimension_numbers<[1], [0], [0], [1], [0, 0, 1, 1], [], []>} : vector<16x128xbf16>, vector<128x256xbf16>, vector<16x256xf32> -> vector<16x256xf32>
    %7 = vector.broadcast %3 : vector<1x256xf32> to vector<16x256xf32>
    %8 = arith.addf %6, %7 : vector<16x256xf32>
    %cst_9 = arith.constant 0.000000e+00 : f32
    %9 = vector.broadcast %cst_9 : f32 to vector<16x256xf32>
    %10 = arith.maximumf %8, %9 : vector<16x256xf32>
    %11 = arith.truncf %10 : vector<16x256xf32> to vector<16x256xbf16>
    %cst_10 = arith.constant dense<0.000000e+00> : vector<16x128xf32>
    %12 = tpu.matmul %11, %2, %cst_10 {dimension_numbers = #tpu.dot_dimension_numbers<[1], [0], [0], [1], [0, 0, 1, 1], [], []>} : vector<16x256xbf16>, vector<256x128xbf16>, vector<16x128xf32> -> vector<16x128xf32>
    %13 = vector.broadcast %4 : vector<1x128xf32> to vector<16x128xf32>
    %14 = arith.addf %12, %13 : vector<16x128xf32>
    %15 = arith.addf %14, %0 : vector<16x128xf32>
    %c0_11 = arith.constant 0 : index
    %c0_12 = arith.constant 0 : index
    %16 = vector.load %arg6[%c0_11, %c0_12] : memref<16x128xf32, #tpu.memory_space<vmem>>, vector<16x128xf32>
    tpu.vector_store %arg6[%c0_11, %c0_12], %15 {strides = array<i32>} : memref<16x128xf32, #tpu.memory_space<vmem>>, vector<16x128xf32>,
    return
  }
  func.func @transform_0(%arg0: i32) -> (i32, i32) {
    %c0_i32 = arith.constant 0 : i32
    %c0_i32_0 = arith.constant 0 : i32
    return %arg0, %c0_i32 : i32, i32
  }
  func.func @transform_1(%arg0: i32) -> (i32, i32) {
    %c0_i32 = arith.constant 0 : i32
    %c0_i32_0 = arith.constant 0 : i32
    %c0_i32_1 = arith.constant 0 : i32
    return %c0_i32, %c0_i32_0 : i32, i32
  }
  func.func @transform_2(%arg0: i32) -> (i32, i32) {
    %c0_i32 = arith.constant 0 : i32
    %c0_i32_0 = arith.constant 0 : i32
    %c0_i32_1 = arith.constant 0 : i32
    return %c0_i32, %c0_i32_0 : i32, i32
  }
  func.func @transform_3(%arg0: i32) -> (i32, i32) {
    %c0_i32 = arith.constant 0 : i32
    %c0_i32_0 = arith.constant 0 : i32
    %c0_i32_1 = arith.constant 0 : i32
    return %c0_i32, %c0_i32_0 : i32, i32
  }
  func.func @transform_4(%arg0: i32) -> (i32, i32) {
    %c0_i32 = arith.constant 0 : i32
    %c0_i32_0 = arith.constant 0 : i32
    %c0_i32_1 = arith.constant 0 : i32
    return %c0_i32, %c0_i32_0 : i32, i32
  }
  func.func @transform_5(%arg0: i32) -> (i32, i32) {
    %c0_i32 = arith.constant 0 : i32
    %c0_i32_0 = arith.constant 0 : i32
    return %arg0, %c0_i32 : i32, i32
  }
}

module attributes {stable_mosaic.version = 11 : i64} {
  func.func @residual_mlp_kernel(%arg0: i32, %arg1: memref<16x128xf32, #tpu.memory_space<vmem>>, %arg2: memref<128x256xbf16, #tpu.memory_space<vmem>>, %arg3: memref<1x256xf32, #tpu.memory_space<vmem>>, %arg4: memref<256x128xbf16, #tpu.memory_space<vmem>>, %arg5: memref<1x128xf32, #tpu.memory_space<vmem>>, %arg6: memref<16x128xf32, #tpu.memory_space<vmem>>) attributes {dimension_semantics = [#tpu.dimension_semantics<parallel>], iteration_bounds = array<i64: 4>, scalar_prefetch = 0 : i64, scratch_operands = 0 : i64, tpu.core_type = #tpu.core_type<tc>, window_params = [{transform_indices = @transform_0, window_bounds = array<i64: 16, 128>}, {pipeline_mode = #tpu.pipeline_mode<synchronous>, transform_indices = @transform_1, window_bounds = array<i64: 128, 256>}, {pipeline_mode = #tpu.pipeline_mode<synchronous>, transform_indices = @transform_2, window_bounds = array<i64: 1, 256>}, {pipeline_mode = #tpu.pipeline_mode<synchronous>, transform_indices = @transform_3, window_bounds = array<i64: 256, 128>}, {pipeline_mode = #tpu.pipeline_mode<synchronous>, transform_indices = @transform_4, window_bounds = array<i64: 1, 128>}, {transform_indices = @transform_5, window_bounds = array<i64: 16, 128>}]} {
    %c0 = arith.constant 0 : index
    %c0_0 = arith.constant 0 : index
    %0 = vector.load %arg1[%c0, %c0_0] : memref<16x128xf32, #tpu.memory_space<vmem>>, vector<16x128xf32>
    %c0_1 = arith.constant 0 : index
    %c0_2 = arith.constant 0 : index
    %1 = vector.load %arg2[%c0_1, %c0_2] : memref<128x256xbf16, #tpu.memory_space<vmem>>, vector<128x256xbf16>
    %c0_3 = arith.constant 0 : index
    %c0_4 = arith.constant 0 : index
    %2 = vector.load %arg4[%c0_3, %c0_4] : memref<256x128xbf16, #tpu.memory_space<vmem>>, vector<256x128xbf16>
    %c0_5 = arith.constant 0 : index
    %c0_6 = arith.constant 0 : index
    %3 = vector.load %arg3[%c0_5, %c0_6] : memref<1x256xf32, #tpu.memory_space<vmem>>, vector<1x256xf32>
    %c0_7 = arith.constant 0 : index
    %c0_8 = arith.constant 0 : index
    %4 = vector.load %arg5[%c0_7, %c0_8] : memref<1x128xf32, #tpu.memory_space<vmem>>, vector<1x128xf32>
    %5 = arith.truncf %0 : vector<16x128xf32> to vector<16x128xbf16>
    %cst = arith.constant dense<0.000000e+00> : vector<16x256xf32>
    %6 = tpu.matmul %5, %1, %cst {dimension_numbers = #tpu.dot_dimension_numbers<[1], [0], [0], [1], [0, 0, 1, 1], [], []>} : vector<16x128xbf16>, vector<128x256xbf16>, vector<16x256xf32> -> vector<16x256xf32>
    %7 = vector.broadcast %3 : vector<1x256xf32> to vector<16x256xf32>
    %8 = arith.addf %6, %7 : vector<16x256xf32>
    %cst_9 = arith.constant 0.000000e+00 : f32
    %9 = vector.broadcast %cst_9 : f32 to vector<16x256xf32>
    %10 = arith.maximumf %8, %9 : vector<16x256xf32>
    %11 = arith.truncf %10 : vector<16x256xf32> to vector<16x256xbf16>
    %cst_10 = arith.constant dense<0.000000e+00> : vector<16x128xf32>
    %12 = tpu.matmul %11, %2, %cst_10 {dimension_numbers = #tpu.dot_dimension_numbers<[1], [0], [0], [1], [0, 0, 1, 1], [], []>} : vector<16x256xbf16>, vector<256x128xbf16>, vector<16x128xf32> -> vector<16x128xf32>
    %13 = vector.broadcast %4 : vector<1x128xf32> to vector<16x128xf32>
    %14 = arith.addf %12, %13 : vector<16x128xf32>
    %15 = arith.addf %14, %0 : vector<16x128xf32>
    %c0_11 = arith.constant 0 : index
    %c0_12 = arith.constant 0 : index
    %16 = vector.load %arg6[%c0_11, %c0_12] : memref<16x128xf32, #tpu.memory_space<vmem>>, vector<16x128xf32>
    tpu.vector_store %arg6[%c0_11, %c0_12], %15 {strides = array<i32>} : memref<16x128xf32, #tpu.memory_space<vmem>>, vector<16x128xf32>,
    return
  }
  func.func @transform_0(%arg0: i32) -> (i32, i32) {
    %c0_i32 = arith.constant 0 : i32
    %c0_i32_0 = arith.constant 0 : i32
    return %arg0, %c0_i32 : i32, i32
  }
  func.func @transform_1(%arg0: i32) -> (i32, i32) {
    %c0_i32 = arith.constant 0 : i32
    %c0_i32_0 = arith.constant 0 : i32
    %c0_i32_1 = arith.constant 0 : i32
    return %c0_i32, %c0_i32_0 : i32, i32
  }
  func.func @transform_2(%arg0: i32) -> (i32, i32) {
    %c0_i32 = arith.constant 0 : i32
    %c0_i32_0 = arith.constant 0 : i32
    %c0_i32_1 = arith.constant 0 : i32
    return %c0_i32, %c0_i32_0 : i32, i32
  }
  func.func @transform_3(%arg0: i32) -> (i32, i32) {
    %c0_i32 = arith.constant 0 : i32
    %c0_i32_0 = arith.constant 0 : i32
    %c0_i32_1 = arith.constant 0 : i32
    return %c0_i32, %c0_i32_0 : i32, i32
  }
  func.func @transform_4(%arg0: i32) -> (i32, i32) {
    %c0_i32 = arith.constant 0 : i32
    %c0_i32_0 = arith.constant 0 : i32
    %c0_i32_1 = arith.constant 0 : i32
    return %c0_i32, %c0_i32_0 : i32, i32
  }
  func.func @transform_5(%arg0: i32) -> (i32, i32) {
    %c0_i32 = arith.constant 0 : i32
    %c0_i32_0 = arith.constant 0 : i32
    return %arg0, %c0_i32 : i32, i32
  }
}

</mosaic_0001>

<llo_original>
// kernel: tpu_custom_call.1
$region0: #{tpu_custom_call.1}
  #allocation0 [shape = 'u32[]', space=smem, size = 0x4, offset = 0x4, fixed_abs, tag = 'smem constant byte address 0x4 - core index']
  #allocation1 [shape = 'u32[144,128]{1,0:T(1,128)}', space=vmem, size = 0x12000, scoped, tag = 'internal scratch']
  %s0 = inlined_call_operand.hbm [shape: f32[64,128], index: 0, kind: input, shape index: {}, may-alias: {0,5}]
  %s1 = inlined_call_operand.vmem [shape: bf16[128,256], index: 1, kind: input, shape index: {}]
  %s2 = inlined_call_operand.vmem [shape: f32[1,256], index: 2, kind: input, shape index: {}]
  %s3 = inlined_call_operand.hbm [shape: bf16[256,128], index: 3, kind: input, shape index: {}]
  %s4 = inlined_call_operand.vmem [shape: f32[1,128], index: 4, kind: input, shape index: {}]
  %s5 = inlined_call_operand.hbm [shape: f32[64,128], index: 5, kind: output, shape index: {}, may-alias: {0,5}]
  %s6 = sld [smem:[#allocation0]]
  $region61: #{tpu_custom_call.1} parent=0
    _
  %s8 = ssub.s32 1, %s6
  %s9 = scalar_select 0, %s8, %s6
  $region1: #{tpu_custom_call.1} parent=0
    #allocation2 [shape = 'u8[16384]{0}', space=vmem, size = 0x4000, scoped, tag = 'input window, operand 0']
    #allocation3 [shape = 's32[2]{0}', space=sflag, size = 0x8, scoped, tag = 'scoped memory for tpu_custom_call.1']
    #allocation4 [shape = 's32[2]{0}', space=sflag, size = 0x8, scoped, tag = 'scoped memory for tpu_custom_call.1']
    #allocation5 [shape = 'u8[65536]{0}', space=vmem, size = 0x10000, scoped, tag = 'input window, operand 3, single buffered']
    #allocation6 [shape = 's32[1]{0}', space=sflag, size = 0x4, scoped, tag = 'scoped memory for tpu_custom_call.1']
    #allocation7 [shape = 'u8[16384]{0}', space=vmem, size = 0x4000, scoped, tag = 'output window, operand 0']
    %10 = vsyncpa [#allocation3], 0
    %s11 = scalar_lea.sflag [#allocation3], 1
    %12 = vsyncpa %s11, 0
    %13 = vsyncpa [#allocation6], 0
    %14 = vsyncpa [#allocation4], 0
    %s15 = scalar_lea.sflag [#allocation4], 1
    %16 = vsyncpa %s15, 0
    loop: start=0, step=1, limit=6
    $region2: #{tpu_custom_call.1} parent=1 // loop_pre_header
      _
    $region3: #{tpu_custom_call.1} parent=1 // loop_header
      %s18 = sphi 0, %s22
      %p19 = scmp.ge.s32.totalorder %s18, 6
      %s28 = sphi 0, %s30
      %s31 = sphi 0, %s28
      %s32 = sphi 0, %s31
      %s48 = sphi 0, %s32
      %s52 = sphi 0, %s52
      %s54 = sphi 0, %s52
      %s55 = sphi 0, %s54
      %s69 = sphi 0, %s55
      %s73 = sphi 0, %s73
      %s75 = sphi 0, %s73
      %s76 = sphi 0, %s75
      %s90 = sphi 0, %s76
      %s94 = sphi 0, %s94
      %s96 = sphi 0, %s94
      %s97 = sphi 0, %s96
      %s111 = sphi 0, %s97
      %s115 = sphi 0, %s115
      %s117 = sphi 0, %s115
      %s118 = sphi 0, %s117
      %s132 = sphi 0, %s118
      %s138 = sphi 0, %s140
      %s141 = sphi 0, %s138
      %s142 = sphi 0, %s141
      %s158 = sphi 0, %s142
    $region4: #{tpu_custom_call.1} parent=1 // loop_header_branch
      %21 = sbr.rel (%p19) target = $region8
    $region5: #{tpu_custom_call.1} parent=1 // loop_body
      %s23 = ssub.s32 %s18, 1
      %s24 = ssub.s32 %s18, 2
      %s25 = sadd.s32 %s18, 1
      %s26 = ssub.s32 %s18, %s25
      %p27 = scmp.eq.s32.totalorder %s26, 0
      %s29 = sadd.s32 %s28, 1
      %s30 = scalar_select %p27, %s28, %s29
      %p33 = pneg %p27
      %p34 = scmp.eq.s32.totalorder %s18, 3
      %p35 = por %p33, %p34
      %p36 = scmp.ne.s32.totalorder %s28, %s31
      %p37 = scmp.eq.s32.totalorder %s18, 0
      %p38 = por %p36, %p37
      %p39 = scmp.ne.s32.totalorder %s28, %s31
      %p40 = scmp.eq.s32.totalorder %s23, 3
      %p41 = por %p39, %p40
      %p42 = scmp.ne.s32.totalorder %s31, %s32
      %p43 = scmp.eq.s32.totalorder %s23, 0
      %p44 = por %p42, %p43
      %p45 = scmp.ne.s32.totalorder %s31, %s32
      %p46 = scmp.eq.s32.totalorder %s24, 3
      %p47 = por %p45, %p46
      %p49 = scmp.ne.s32.totalorder %s32, %s48
      %p50 = scmp.eq.s32.totalorder %s24, 0
      %p51 = por %p49, %p50
      %s53 = sadd.s32 %s52, 1
      %p56 = scmp.eq.s32.totalorder %s18, 3
      %p57 = scmp.ne.s32.totalorder %s52, %s54
      %p58 = scmp.eq.s32.totalorder %s18, 0
      %p59 = por %p57, %p58
      %p60 = scmp.ne.s32.totalorder %s52, %s54
      %p61 = scmp.eq.s32.totalorder %s23, 3
      %p62 = por %p60, %p61
      %p63 = scmp.ne.s32.totalorder %s54, %s55
      %p64 = scmp.eq.s32.totalorder %s23, 0
      %p65 = por %p63, %p64
      %p66 = scmp.ne.s32.totalorder %s54, %s55
      %p67 = scmp.eq.s32.totalorder %s24, 3
      %p68 = por %p66, %p67
      %p70 = scmp.ne.s32.totalorder %s55, %s69
      %p71 = scmp.eq.s32.totalorder %s24, 0
      %p72 = por %p70, %p71
      %s74 = sadd.s32 %s73, 1
      %p77 = scmp.eq.s32.totalorder %s18, 3
      %p78 = scmp.ne.s32.totalorder %s73, %s75
      %p79 = scmp.eq.s32.totalorder %s18, 0
      %p80 = por %p78, %p79
      %p81 = scmp.ne.s32.totalorder %s73, %s75
      %p82 = scmp.eq.s32.totalorder %s23, 3
      %p83 = por %p81, %p82
      %p84 = scmp.ne.s32.totalorder %s75, %s76
      %p85 = scmp.eq.s32.totalorder %s23, 0
      %p86 = por %p84, %p85
      %p87 = scmp.ne.s32.totalorder %s75, %s76
      %p88 = scmp.eq.s32.totalorder %s24, 3
      %p89 = por %p87, %p88
      %p91 = scmp.ne.s32.totalorder %s76, %s90
      %p92 = scmp.eq.s32.totalorder %s24, 0
      %p93 = por %p91, %p92
      %s95 = sadd.s32 %s94, 1
      %p98 = scmp.eq.s32.totalorder %s18, 3
      %p99 = scmp.ne.s32.totalorder %s94, %s96
      %p100 = scmp.eq.s32.totalorder %s18, 0
      %p101 = por %p99, %p100
      %p102 = scmp.ne.s32.totalorder %s94, %s96
      %p103 = scmp.eq.s32.totalorder %s23, 3
      %p104 = por %p102, %p103
      %p105 = scmp.ne.s32.totalorder %s96, %s97
      %p106 = scmp.eq.s32.totalorder %s23, 0
      %p107 = por %p105, %p106
      %p108 = scmp.ne.s32.totalorder %s96, %s97
      %p109 = scmp.eq.s32.totalorder %s24, 3
      %p110 = por %p108, %p109
      %p112 = scmp.ne.s32.totalorder %s97, %s111
      %p113 = scmp.eq.s32.totalorder %s24, 0
      %p114 = por %p112, %p113
      %s116 = sadd.s32 %s115, 1
      %p119 = scmp.eq.s32.totalorder %s18, 3
      %p120 = scmp.ne.s32.totalorder %s115, %s117
      %p121 = scmp.eq.s32.totalorder %s18, 0
      %p122 = por %p120, %p121
      %p123 = scmp.ne.s32.totalorder %s115, %s117
      %p124 = scmp.eq.s32.totalorder %s23, 3
      %p125 = por %p123, %p124
      %p126 = scmp.ne.s32.totalorder %s117, %s118
      %p127 = scmp.eq.s32.totalorder %s23, 0
      %p128 = por %p126, %p127
      %p129 = scmp.ne.s32.totalorder %s117, %s118
      %p130 = scmp.eq.s32.totalorder %s24, 3
      %p131 = por %p129, %p130
      %p133 = scmp.ne.s32.totalorder %s118, %s132
      %p134 = scmp.eq.s32.totalorder %s24, 0
      %p135 = por %p133, %p134
      %s136 = ssub.s32 %s18, %s25
      %p137 = scmp.eq.s32.totalorder %s136, 0
      %s139 = sadd.s32 %s138, 1
      %s140 = scalar_select %p137, %s138, %s139
      %p143 = pneg %p137
      %p144 = scmp.eq.s32.totalorder %s18, 3
      %p145 = por %p143, %p144
      %p146 = scmp.ne.s32.totalorder %s138, %s141
      %p147 = scmp.eq.s32.totalorder %s18, 0
      %p148 = por %p146, %p147
      %p149 = scmp.ne.s32.totalorder %s138, %s141
      %p150 = scmp.eq.s32.totalorder %s23, 3
      %p151 = por %p149, %p150
      %p152 = scmp.ne.s32.totalorder %s141, %s142
      %p153 = scmp.eq.s32.totalorder %s23, 0
      %p154 = por %p152, %p153
      %p155 = scmp.ne.s32.totalorder %s141, %s142
      %p156 = scmp.eq.s32.totalorder %s24, 3
      %p157 = por %p155, %p156
      %p159 = scmp.ne.s32.totalorder %s142, %s158
      %p160 = scmp.eq.s32.totalorder %s24, 0
      %p161 = por %p159, %p160
      %p162 = scmp.le.s32.totalorder 1, %s18
      %p163 = scmp.lt.s32.totalorder %s18, 5
      %p164 = pnand %p162, %p163
      %p165 = pneg %p164
      // Predicated region
      $region9: #{tpu_custom_call.1} parent=5 // pred_check
        _
      $region10: #{tpu_custom_call.1} parent=5 // pred_check_branch
        %167 = sbr.rel (%p164) target = $region12
      $region11: #{tpu_custom_call.1} parent=5 // pred_region
        %s168 = ssub.s32 %s18, 1
        // Predicated region
        $region13: #{tpu_custom_call.1} parent=11 // pred_check
          %p169 = pneg %p65
        $region14: #{tpu_custom_call.1} parent=11 // pred_check_branch
          %171 = sbr.rel (%p169) target = $region16
        $region15: #{tpu_custom_call.1} parent=11 // pred_region
          _
        $region16: #{tpu_custom_call.1} parent=11 // pred_fallthru
          _
        // Predicated region
        $region17: #{tpu_custom_call.1} parent=11 // pred_check
          %p172 = pneg %p86
        $region18: #{tpu_custom_call.1} parent=11 // pred_check_branch
          %174 = sbr.rel (%p172) target = $region20
        $region19: #{tpu_custom_call.1} parent=11 // pred_region
          _
        $region20: #{tpu_custom_call.1} parent=11 // pred_fallthru
          _
        // Predicated region
        $region21: #{tpu_custom_call.1} parent=11 // pred_check
          %p175 = pneg %p107
        $region22: #{tpu_custom_call.1} parent=11 // pred_check_branch
          %177 = sbr.rel (%p175) target = $region24
        $region23: #{tpu_custom_call.1} parent=11 // pred_region
          %s179 = ssub.s32 2048, 2048
          %180 = vsyncadd [#allocation6], %s179
          %s181 = sshll.u32 [#allocation5], 4
          %s182 = int_to_ptr.vmem [resolvable:$true] %s181
          %187 = dma.hbm_to_vmem [thread:$0]  %s3, 2048, %s182, [#allocation6], 64, 64, 4
        $region24: #{tpu_custom_call.1} parent=11 // pred_fallthru
          _
        // Predicated region
        $region25: #{tpu_custom_call.1} parent=11 // pred_check
          %p188 = pneg %p128
        $region26: #{tpu_custom_call.1} parent=11 // pred_check_branch
          %190 = sbr.rel (%p188) target = $region28
        $region27: #{tpu_custom_call.1} parent=11 // pred_region
          _
        $region28: #{tpu_custom_call.1} parent=11 // pred_fallthru
          _
      $region12: #{tpu_custom_call.1} parent=5 // pred_fallthru
        _
      %p191 = scmp.lt.s32.totalorder %s18, 4
      // Predicated region
      $region29: #{tpu_custom_call.1} parent=5 // pred_check
        %p192 = pneg %p191
      $region30: #{tpu_custom_call.1} parent=5 // pred_check_branch
        %194 = sbr.rel (%p192) target = $region32
      $region31: #{tpu_custom_call.1} parent=5 // pred_region
        // Predicated region
        $region33: #{tpu_custom_call.1} parent=31 // pred_check
          %p195 = pneg %p38
        $region34: #{tpu_custom_call.1} parent=31 // pred_check_branch
          %197 = sbr.rel (%p195) target = $region36
        $region35: #{tpu_custom_call.1} parent=31 // pred_region
          %s198 = sand.u32 %s28, 1
          %s199 = scalar_lea.sflag [#allocation3], %s198
          %s200 = sand.u32 %s28, 1
          %s201 = smul.addr %s200, 16
          %s202 = scalar_lea.vmem [#allocation2], %s201
          %s203 = smul.u32 2, %s18
          %s205 = ssub.s32 256, 256
          %206 = vsyncadd %s199, %s205
          %s207 = smul.addr %s203, 128
          %s208 = scalar_lea.hbm %s0, %s207
          %s209 = sshll.u32 %s202, 4
          %s210 = int_to_ptr.vmem [resolvable:$true] %s209
          %215 = dma.hbm_to_vmem [thread:$0]  %s208, 256, %s210, %s199, 128, 128, 8
        $region36: #{tpu_custom_call.1} parent=31 // pred_fallthru
          _
      $region32: #{tpu_custom_call.1} parent=5 // pred_fallthru
        _
      %p216 = scmp.le.s32.totalorder 1, %s18
      %p217 = scmp.lt.s32.totalorder %s18, 5
      %p218 = pnand %p216, %p217
      %p219 = pneg %p218
      // Predicated region
      $region37: #{tpu_custom_call.1} parent=5 // pred_check
        _
      $region38: #{tpu_custom_call.1} parent=5 // pred_check_branch
        %221 = sbr.rel (%p218) target = $region40
      $region39: #{tpu_custom_call.1} parent=5 // pred_region
        %s222 = ssub.s32 %s18, 1
        %s223 = sand.u32 %s31, 1
        %s224 = scalar_lea.sflag [#allocation3], %s223
        %s225 = sand.u32 %s31, 1
        %s226 = smul.addr %s225, 16
        %s227 = scalar_lea.vmem [#allocation2], %s226
        // Predicated region
        $region41: #{tpu_custom_call.1} parent=39 // pred_check
          %p228 = pneg %p44
        $region42: #{tpu_custom_call.1} parent=39 // pred_check_branch
          %230 = sbr.rel (%p228) target = $region44
        $region43: #{tpu_custom_call.1} parent=39 // pred_region
          %231 = dma.done %s224, 256
        $region44: #{tpu_custom_call.1} parent=39 // pred_fallthru
          _
        // Predicated region
        $region45: #{tpu_custom_call.1} parent=39 // pred_check
          %p232 = pneg %p107
        $region46: #{tpu_custom_call.1} parent=39 // pred_check_branch
          %234 = sbr.rel (%p232) target = $region48
        $region47: #{tpu_custom_call.1} parent=39 // pred_region
          %235 = dma.done [#allocation6], 2048
        $region48: #{tpu_custom_call.1} parent=39 // pred_fallthru
          _
        %s236 = sand.u32 %s31, 1
        %s237 = scalar_lea.sflag [#allocation3], %s236
        %s238 = sand.u32 %s31, 1
        %s239 = smul.addr %s238, 16
        %s240 = scalar_lea.vmem [#allocation2], %s239
        %p241 = pneg %p44
        %p242 = pneg %p41
        %p243 = pneg %p65
        %p244 = pneg %p62
        %p245 = pneg %p86
        %p246 = pneg %p83
        %p247 = pneg %p107
        %p248 = pneg %p104
        %p249 = pneg %p128
        %p250 = pneg %p125
        %p251 = pneg %p154
        %p252 = pneg %p151
        %s253 = sand.u32 %s141, 1
        %s254 = scalar_lea.sflag [#allocation4], %s253
        %s255 = sand.u32 %s141, 1
        %s256 = smul.addr %s255, 16
        %s257 = scalar_lea.vmem [#allocation7], %s256
        %s258 = smul.u32 2, %s23
        %s259 = smul.u32 2, %s23
        %v261 = vld [vmem:[%s227] sm:$0xff]
        %v262 = vld [vmem:[%s227 + $0x8] sm:$0xff]
        %v263 = vld [vmem:[%s1] sm:$0xff]
        %v264 = vld [vmem:[%s1 + $0x8] sm:$0xff]
        %v265 = vld [vmem:[%s1 + $0x10] sm:$0xff]
        %v266 = vld [vmem:[%s1 + $0x18] sm:$0xff]
        %v267 = vld [vmem:[%s1 + $0x20] sm:$0xff]
        %v268 = vld [vmem:[%s1 + $0x28] sm:$0xff]
        %v269 = vld [vmem:[%s1 + $0x30] sm:$0xff]
        %v270 = vld [vmem:[%s1 + $0x38] sm:$0xff]
        %v271 = vld [vmem:[%s1 + $0x40] sm:$0xff]
        %v272 = vld [vmem:[%s1 + $0x48] sm:$0xff]
        %v273 = vld [vmem:[%s1 + $0x50] sm:$0xff]
        %v274 = vld [vmem:[%s1 + $0x58] sm:$0xff]
        %v275 = vld [vmem:[%s1 + $0x60] sm:$0xff]
        %v276 = vld [vmem:[%s1 + $0x68] sm:$0xff]
        %v277 = vld [vmem:[%s1 + $0x70] sm:$0xff]
        %v278 = vld [vmem:[%s1 + $0x78] sm:$0xff]
        %v279 = vld [vmem:[#allocation5] sm:$0xf]
        %v280 = vld [vmem:[#allocation5 + $0x4] sm:$0xf]
        %v281 = vld [vmem:[#allocation5 + $0x8] sm:$0xf]
        %v282 = vld [vmem:[#allocation5 + $0xc] sm:$0xf]
        %v283 = vld [vmem:[#allocation5 + $0x10] sm:$0xf]
        %v284 = vld [vmem:[#allocation5 + $0x14] sm:$0xf]
        %v285 = vld [vmem:[#allocation5 + $0x18] sm:$0xf]
        %v286 = vld [vmem:[#allocation5 + $0x1c] sm:$0xf]
        %v287 = vld [vmem:[#allocation5 + $0x20] sm:$0xf]
        %v288 = vld [vmem:[#allocation5 + $0x24] sm:$0xf]
        %v289 = vld [vmem:[#allocation5 + $0x28] sm:$0xf]
        %v290 = vld [vmem:[#allocation5 + $0x2c] sm:$0xf]
        %v291 = vld [vmem:[#allocation5 + $0x30] sm:$0xf]
        %v292 = vld [vmem:[#allocation5 + $0x34] sm:$0xf]
        %v293 = vld [vmem:[#allocation5 + $0x38] sm:$0xf]
        %v294 = vld [vmem:[#allocation5 + $0x3c] sm:$0xf]
        %v295 = vld [vmem:[#allocation5 + $0x40] sm:$0xf]
        %v296 = vld [vmem:[#allocation5 + $0x44] sm:$0xf]
        %v297 = vld [vmem:[#allocation5 + $0x48] sm:$0xf]
        %v298 = vld [vmem:[#allocation5 + $0x4c] sm:$0xf]
        %v299 = vld [vmem:[#allocation5 + $0x50] sm:$0xf]
        %v300 = vld [vmem:[#allocation5 + $0x54] sm:$0xf]
        %v301 = vld [vmem:[#allocation5 + $0x58] sm:$0xf]
        %v302 = vld [vmem:[#allocation5 + $0x5c] sm:$0xf]
        %v303 = vld [vmem:[#allocation5 + $0x60] sm:$0xf]
        %v304 = vld [vmem:[#allocation5 + $0x64] sm:$0xf]
        %v305 = vld [vmem:[#allocation5 + $0x68] sm:$0xf]
        %v306 = vld [vmem:[#allocation5 + $0x6c] sm:$0xf]
        %v307 = vld [vmem:[#allocation5 + $0x70] sm:$0xf]
        %v308 = vld [vmem:[#allocation5 + $0x74] sm:$0xf]
        %v309 = vld [vmem:[#allocation5 + $0x78] sm:$0xf]
        %v310 = vld [vmem:[#allocation5 + $0x7c] sm:$0xf]
        %v311 = vld [vmem:[%s2] sm:$0x3]
        %v312 = vld [vmem:[%s4] sm:$0x1]
        %v313 = vpack.c.bf16 %v262, %v261
        %v315 = vlaneseq
        %v316 = vshrl.u32 %v315, 7
        %v317 = vsub.s32 0, %v316
        %v318 = vrot.slane %v311, %v317
        %v319 = vlaneseq
        %v320 = vshrl.u32 %v319, 7
        %v321 = vsub.s32 1, %v320
        %v322 = vrot.slane %v311, %v321
        %v341 = vunpack.c.l.b16 %v263
        %v342 = vunpack.c.h.b16 %v263
        %v343 = vunpack.c.l.b16 %v264
        %v344 = vunpack.c.h.b16 %v264
        %v345 = vunpack.c.l.b16 %v265
        %v346 = vunpack.c.h.b16 %v265
        %v347 = vunpack.c.l.b16 %v266
        %v348 = vunpack.c.h.b16 %v266
        %v349 = vunpack.c.l.b16 %v267
        %v350 = vunpack.c.h.b16 %v267
        %v351 = vunpack.c.l.b16 %v268
        %v352 = vunpack.c.h.b16 %v268
        %v353 = vunpack.c.l.b16 %v269
        %v354 = vunpack.c.h.b16 %v269
        %v355 = vunpack.c.l.b16 %v270
        %v356 = vunpack.c.h.b16 %v270
        %v357 = vunpack.c.l.b16 %v271
        %v358 = vunpack.c.h.b16 %v271
        %v359 = vunpack.c.l.b16 %v272
        %v360 = vunpack.c.h.b16 %v272
        %v361 = vunpack.c.l.b16 %v273
        %v362 = vunpack.c.h.b16 %v273
        %v363 = vunpack.c.l.b16 %v274
        %v364 = vunpack.c.h.b16 %v274
        %v365 = vunpack.c.l.b16 %v275
        %v366 = vunpack.c.h.b16 %v275
        %v367 = vunpack.c.l.b16 %v276
        %v368 = vunpack.c.h.b16 %v276
        %v369 = vunpack.c.l.b16 %v277
        %v370 = vunpack.c.h.b16 %v277
        %v371 = vunpack.c.l.b16 %v278
        %v372 = vunpack.c.h.b16 %v278
        %v373 = vpack.c.b16 %v343, %v341
        %v374 = vpack.c.b16 %v344, %v342
        %v375 = vpack.c.b16 %v347, %v345
        %v376 = vpack.c.b16 %v348, %v346
        %v377 = vpack.c.b16 %v351, %v349
        %v378 = vpack.c.b16 %v352, %v350
        %v379 = vpack.c.b16 %v355, %v353
        %v380 = vpack.c.b16 %v356, %v354
        %v381 = vpack.c.b16 %v359, %v357
        %v382 = vpack.c.b16 %v360, %v358
        %v383 = vpack.c.b16 %v363, %v361
        %v384 = vpack.c.b16 %v364, %v362
        %v385 = vpack.c.b16 %v367, %v365
        %v386 = vpack.c.b16 %v368, %v366
        %v387 = vpack.c.b16 %v371, %v369
        %v388 = vpack.c.b16 %v372, %v370
        %405 = vmatprep.subr.bf16.mxu0 %v374
        %406 = vmatpush1.bf16.msra.mxu0 %v373
        %407 = vmatprep.subr.bf16.mxu0 %v376
        %408 = vmatpush1.bf16.msra.mxu0 %v375
        %409 = vmatprep.subr.bf16.mxu0 %v378
        %410 = vmatpush1.bf16.msra.mxu0 %v377
        %411 = vmatprep.subr.bf16.mxu0 %v380
        %412 = vmatpush1.bf16.msra.mxu0 %v379
        %413 = vmatprep.subr.bf16.mxu0 %v382
        %414 = vmatpush1.bf16.msra.mxu0 %v381
        %415 = vmatprep.subr.bf16.mxu0 %v384
        %416 = vmatpush1.bf16.msra.mxu0 %v383
        %417 = vmatprep.subr.bf16.mxu0 %v386
        %418 = vmatpush1.bf16.msra.mxu0 %v385
        %419 = vmatprep.subr.bf16.mxu0 %v388
        %420 = vmatpush1.bf16.msra.mxu0 %v387
        %421 = vmatprep.subr.bf16.mxu0 0
        %422 = vmatpush1.bf16.msra.mxu0 0
        %423 = vmatprep.subr.bf16.mxu0 0
        %424 = vmatpush1.bf16.msra.mxu0 0
        %425 = vmatprep.subr.bf16.mxu0 0
        %426 = vmatpush1.bf16.msra.mxu0 0
        %427 = vmatprep.subr.bf16.mxu0 0
        %428 = vmatpush1.bf16.msra.mxu0 0
        %429 = vmatprep.subr.bf16.mxu0 0
        %430 = vmatpush1.bf16.msra.mxu0 0
        %431 = vmatprep.subr.bf16.mxu0 0
        %432 = vmatpush1.bf16.msra.mxu0 0
        %433 = vmatprep.subr.bf16.mxu0 0
        %434 = vmatpush1.bf16.msra.mxu0 0
        %435 = vmatprep.subr.bf16.mxu0 0
        %436 = vmatpush1.bf16.msra.mxu0 0
        %437 = vmatprep.mubr.bf16.mxu0 0
        %438 = vmatmul.mubr.bf16.gmra.mrb[0].mxu0 %v313
        %v439 = vpop.f32.mrb[0].mxu0
        %v440 = vadd.f32 %v318, %v439
        %v441 = vpop.f32.mrb[0].mxu0
        %v442 = vadd.f32 %v322, %v441
        %v443 = vpop.f32.mrb[0].mxu0
        %v444 = vadd.f32 %v318, %v443
        %v445 = vpop.f32.mrb[0].mxu0
        %v446 = vadd.f32 %v322, %v445
        %447 = vdwg.mxu0
        %v448 = vmax.f32 %v440, 0.0
        %v449 = vmax.f32 %v442, 0.0
        %v450 = vmax.f32 %v444, 0.0
        %v451 = vmax.f32 %v446, 0.0
        %v452 = vpack.c.bf16 %v450, %v448
        %v453 = vpack.c.bf16 %v451, %v449
        %v455 = vlaneseq
        %v456 = vshrl.u32 %v455, 7
        %v457 = vsub.s32 0, %v456
        %v458 = vrot.slane %v312, %v457
        %v492 = vunpack.c.l.b16 %v279
        %v493 = vunpack.c.l.b16 %v280
        %v494 = vunpack.c.l.b16 %v281
        %v495 = vunpack.c.l.b16 %v282
        %v496 = vunpack.c.l.b16 %v283
        %v497 = vunpack.c.l.b16 %v284
        %v498 = vunpack.c.l.b16 %v285
        %v499 = vunpack.c.l.b16 %v286
        %v500 = vunpack.c.l.b16 %v287
        %v501 = vunpack.c.l.b16 %v288
        %v502 = vunpack.c.l.b16 %v289
        %v503 = vunpack.c.l.b16 %v290
        %v504 = vunpack.c.l.b16 %v291
        %v505 = vunpack.c.l.b16 %v292
        %v506 = vunpack.c.l.b16 %v293
        %v507 = vunpack.c.l.b16 %v294
        %v508 = vunpack.c.l.b16 %v295
        %v509 = vunpack.c.l.b16 %v296
        %v510 = vunpack.c.l.b16 %v297
        %v511 = vunpack.c.l.b16 %v298
        %v512 = vunpack.c.l.b16 %v299
        %v513 = vunpack.c.l.b16 %v300
        %v514 = vunpack.c.l.b16 %v301
        %v515 = vunpack.c.l.b16 %v302
        %v516 = vunpack.c.l.b16 %v303
        %v517 = vunpack.c.l.b16 %v304
        %v518 = vunpack.c.l.b16 %v305
        %v519 = vunpack.c.l.b16 %v306
        %v520 = vunpack.c.l.b16 %v307
        %v521 = vunpack.c.l.b16 %v308
        %v522 = vunpack.c.l.b16 %v309
        %v523 = vunpack.c.l.b16 %v310
        %v524 = vpack.c.b16 %v493, %v492
        %v525 = vpack.c.b16 %v495, %v494
        %v526 = vpack.c.b16 %v497, %v496
        %v527 = vpack.c.b16 %v499, %v498
        %v528 = vpack.c.b16 %v501, %v500
        %v529 = vpack.c.b16 %v503, %v502
        %v530 = vpack.c.b16 %v505, %v504
        %v531 = vpack.c.b16 %v507, %v506
        %v532 = vpack.c.b16 %v509, %v508
        %v533 = vpack.c.b16 %v511, %v510
        %v534 = vpack.c.b16 %v513, %v512
        %v535 = vpack.c.b16 %v515, %v514
        %v536 = vpack.c.b16 %v517, %v516
        %v537 = vpack.c.b16 %v519, %v518
        %v538 = vpack.c.b16 %v521, %v520
        %v539 = vpack.c.b16 %v523, %v522
        %556 = vmatprep.subr.bf16.mxu0 0
        %557 = vmatpush1.bf16.msra.mxu0 %v524
        %558 = vmatprep.subr.bf16.mxu0 0
        %559 = vmatpush1.bf16.msra.mxu0 %v525
        %560 = vmatprep.subr.bf16.mxu0 0
        %561 = vmatpush1.bf16.msra.mxu0 %v526
        %562 = vmatprep.subr.bf16.mxu0 0
        %563 = vmatpush1.bf16.msra.mxu0 %v527
        %564 = vmatprep.subr.bf16.mxu0 0
        %565 = vmatpush1.bf16.msra.mxu0 %v528
        %566 = vmatprep.subr.bf16.mxu0 0
        %567 = vmatpush1.bf16.msra.mxu0 %v529
        %568 = vmatprep.subr.bf16.mxu0 0
        %569 = vmatpush1.bf16.msra.mxu0 %v530
        %570 = vmatprep.subr.bf16.mxu0 0
        %571 = vmatpush1.bf16.msra.mxu0 %v531
        %572 = vmatprep.subr.bf16.mxu0 0
        %573 = vmatpush1.bf16.msra.mxu0 %v532
        %574 = vmatprep.subr.bf16.mxu0 0
        %575 = vmatpush1.bf16.msra.mxu0 %v533
        %576 = vmatprep.subr.bf16.mxu0 0
        %577 = vmatpush1.bf16.msra.mxu0 %v534
        %578 = vmatprep.subr.bf16.mxu0 0
        %579 = vmatpush1.bf16.msra.mxu0 %v535
        %580 = vmatprep.subr.bf16.mxu0 0
        %581 = vmatpush1.bf16.msra.mxu0 %v536
        %582 = vmatprep.subr.bf16.mxu0 0
        %583 = vmatpush1.bf16.msra.mxu0 %v537
        %584 = vmatprep.subr.bf16.mxu0 0
        %585 = vmatpush1.bf16.msra.mxu0 %v538
        %586 = vmatprep.subr.bf16.mxu0 0
        %587 = vmatpush1.bf16.msra.mxu0 %v539
        %588 = vmatprep.mubr.bf16.mxu0 %v453
        %589 = vmatmul.mubr.bf16.gmra.mrb[0].mxu0 %v452
        %v590 = vpop.f32.mrb[0].mxu0
        %v591 = vadd.f32 %v458, %v590
        %v592 = vpop.f32.mrb[0].mxu0
        %v593 = vpop.f32.mrb[0].mxu0
        %v594 = vadd.f32 %v458, %v593
        %v595 = vpop.f32.mrb[0].mxu0
        %596 = vdwg.mxu0
        %v597 = vadd.f32 %v591, %v261
        %v598 = vadd.f32 %v594, %v262
        %599 = vst [vmem:[%s257] sm:$0xff] %v597
        %600 = vst [vmem:[%s257 + $0x8] sm:$0xff] %v598
        %s601 = sand.u32 %s141, 1
        %s602 = scalar_lea.sflag [#allocation4], %s601
        %s603 = sand.u32 %s141, 1
        %s604 = smul.addr %s603, 16
        %s605 = scalar_lea.vmem [#allocation7], %s604
        // Predicated region
        $region49: #{tpu_custom_call.1} parent=39 // pred_check
          %p606 = pneg %p151
        $region50: #{tpu_custom_call.1} parent=39 // pred_check_branch
          %608 = sbr.rel (%p606) target = $region52
        $region51: #{tpu_custom_call.1} parent=39 // pred_region
          %s609 = smul.u32 2, %s23
          %s611 = ssub.s32 256, 256
          %612 = vsyncadd %s602, %s611
          %s613 = smul.addr %s609, 128
          %s614 = scalar_lea.hbm %s5, %s613
          %s615 = sshll.u32 %s605, 4
          %s616 = int_to_ptr.vmem [resolvable:$true] %s615
          %621 = dma.vmem_to_hbm [thread:$0]  %s616, 256, %s614, %s602, 128, 128, 8
        $region52: #{tpu_custom_call.1} parent=39 // pred_fallthru
          _
      $region40: #{tpu_custom_call.1} parent=5 // pred_fallthru
        _
      %p622 = scmp.le.s32.totalorder 2, %s18
      // Predicated region
      $region53: #{tpu_custom_call.1} parent=5 // pred_check
        %p623 = pneg %p622
      $region54: #{tpu_custom_call.1} parent=5 // pred_check_branch
        %625 = sbr.rel (%p623) target = $region56
      $region55: #{tpu_custom_call.1} parent=5 // pred_region
        %s626 = ssub.s32 %s18, 2
        // Predicated region
        $region57: #{tpu_custom_call.1} parent=55 // pred_check
          %p627 = pneg %p157
        $region58: #{tpu_custom_call.1} parent=55 // pred_check_branch
          %629 = sbr.rel (%p627) target = $region60
        $region59: #{tpu_custom_call.1} parent=55 // pred_region
          %s630 = sand.u32 %s142, 1
          %s631 = scalar_lea.sflag [#allocation4], %s630
          %s632 = sand.u32 %s142, 1
          %s633 = smul.addr %s632, 16
          %s634 = scalar_lea.vmem [#allocation7], %s633
          %635 = dma.done %s631, 256
        $region60: #{tpu_custom_call.1} parent=55 // pred_fallthru
          _
      $region56: #{tpu_custom_call.1} parent=5 // pred_fallthru
        _
    $region6: #{tpu_custom_call.1} parent=1 // loop_footer
      %s22 = sadd.s32 1, %s18
    $region7: #{tpu_custom_call.1} parent=1 // loop_footer_branch
      %17 = sbr.rel target = $region3
    $region8: #{tpu_custom_call.1} parent=1 // loop_exit
      _
    %636 = vsyncpa [#allocation3], 1
    %s637 = scalar_lea.sflag [#allocation3], 1
    %638 = vsyncpa %s637, 1
    %639 = vsyncpa [#allocation6], 1
    %640 = vsyncpa [#allocation4], 1
    %s641 = scalar_lea.sflag [#allocation4], 1
    %642 = vsyncpa %s641, 1

// kernel: tpu_custom_call.1
$region0: #{tpu_custom_call.1}
  #allocation0 [shape = 'u32[]', space=smem, size = 0x4, offset = 0x4, fixed_abs, tag = 'smem constant byte address 0x4 - core index']
  #allocation1 [shape = 'u32[144,128]{1,0:T(1,128)}', space=vmem, size = 0x12000, scoped, tag = 'internal scratch']
  %s0 = inlined_call_operand.hbm [shape: f32[64,128], index: 0, kind: input, shape index: {}]
  %s1 = inlined_call_operand.hbm [shape: bf16[128,256], index: 1, kind: input, shape index: {}]
  %s2 = inlined_call_operand.vmem [shape: f32[1,256], index: 2, kind: input, shape index: {}]
  %s3 = inlined_call_operand.hbm [shape: bf16[256,128], index: 3, kind: input, shape index: {}]
  %s4 = inlined_call_operand.vmem [shape: f32[1,128], index: 4, kind: input, shape index: {}]
  %s5 = inlined_call_operand.hbm [shape: f32[64,128], index: 5, kind: output, shape index: {}]
  %s6 = sld [smem:[#allocation0]]
  $region65: #{tpu_custom_call.1} parent=0
    _
  %s8 = ssub.s32 1, %s6
  %s9 = scalar_select 0, %s8, %s6
  $region1: #{tpu_custom_call.1} parent=0
    #allocation2 [shape = 'u8[16384]{0}', space=vmem, size = 0x4000, scoped, tag = 'input window, operand 0']
    #allocation3 [shape = 's32[2]{0}', space=sflag, size = 0x8, scoped, tag = 'scoped memory for tpu_custom_call.1']
    #allocation4 [shape = 's32[2]{0}', space=sflag, size = 0x8, scoped, tag = 'scoped memory for tpu_custom_call.1']
    #allocation5 [shape = 'u8[65536]{0}', space=vmem, size = 0x10000, scoped, tag = 'input window, operand 1, single buffered']
    #allocation6 [shape = 's32[1]{0}', space=sflag, size = 0x4, scoped, tag = 'scoped memory for tpu_custom_call.1']
    #allocation7 [shape = 'u8[65536]{0}', space=vmem, size = 0x10000, scoped, tag = 'input window, operand 3, single buffered']
    #allocation8 [shape = 'u8[16384]{0}', space=vmem, size = 0x4000, scoped, tag = 'output window, operand 0']
    %10 = vsyncpa [#allocation3], 0
    %s11 = scalar_lea.sflag [#allocation3], 1
    %12 = vsyncpa %s11, 0
    %13 = vsyncpa [#allocation6], 0
    %14 = vsyncpa [#allocation4], 0
    %s15 = scalar_lea.sflag [#allocation4], 1
    %16 = vsyncpa %s15, 0
    loop: start=0, step=1, limit=6
    $region2: #{tpu_custom_call.1} parent=1 // loop_pre_header
      _
    $region3: #{tpu_custom_call.1} parent=1 // loop_header
      %s18 = sphi 0, %s22
      %p19 = scmp.ge.s32.totalorder %s18, 6
      %s28 = sphi 0, %s30
      %s31 = sphi 0, %s28
      %s32 = sphi 0, %s31
      %s48 = sphi 0, %s32
      %s52 = sphi 0, %s52
      %s54 = sphi 0, %s52
      %s55 = sphi 0, %s54
      %s69 = sphi 0, %s55
      %s73 = sphi 0, %s73
      %s75 = sphi 0, %s73
      %s76 = sphi 0, %s75
      %s90 = sphi 0, %s76
      %s94 = sphi 0, %s94
      %s96 = sphi 0, %s94
      %s97 = sphi 0, %s96
      %s111 = sphi 0, %s97
      %s115 = sphi 0, %s115
      %s117 = sphi 0, %s115
      %s118 = sphi 0, %s117
      %s132 = sphi 0, %s118
      %s138 = sphi 0, %s140
      %s141 = sphi 0, %s138
      %s142 = sphi 0, %s141
      %s158 = sphi 0, %s142
    $region4: #{tpu_custom_call.1} parent=1 // loop_header_branch
      %21 = sbr.rel (%p19) target = $region8
    $region5: #{tpu_custom_call.1} parent=1 // loop_body
      %s23 = ssub.s32 %s18, 1
      %s24 = ssub.s32 %s18, 2
      %s25 = sadd.s32 %s18, 1
      %s26 = ssub.s32 %s18, %s25
      %p27 = scmp.eq.s32.totalorder %s26, 0
      %s29 = sadd.s32 %s28, 1
      %s30 = scalar_select %p27, %s28, %s29
      %p33 = pneg %p27
      %p34 = scmp.eq.s32.totalorder %s18, 3
      %p35 = por %p33, %p34
      %p36 = scmp.ne.s32.totalorder %s28, %s31
      %p37 = scmp.eq.s32.totalorder %s18, 0
      %p38 = por %p36, %p37
      %p39 = scmp.ne.s32.totalorder %s28, %s31
      %p40 = scmp.eq.s32.totalorder %s23, 3
      %p41 = por %p39, %p40
      %p42 = scmp.ne.s32.totalorder %s31, %s32
      %p43 = scmp.eq.s32.totalorder %s23, 0
      %p44 = por %p42, %p43
      %p45 = scmp.ne.s32.totalorder %s31, %s32
      %p46 = scmp.eq.s32.totalorder %s24, 3
      %p47 = por %p45, %p46
      %p49 = scmp.ne.s32.totalorder %s32, %s48
      %p50 = scmp.eq.s32.totalorder %s24, 0
      %p51 = por %p49, %p50
      %s53 = sadd.s32 %s52, 1
      %p56 = scmp.eq.s32.totalorder %s18, 3
      %p57 = scmp.ne.s32.totalorder %s52, %s54
      %p58 = scmp.eq.s32.totalorder %s18, 0
      %p59 = por %p57, %p58
      %p60 = scmp.ne.s32.totalorder %s52, %s54
      %p61 = scmp.eq.s32.totalorder %s23, 3
      %p62 = por %p60, %p61
      %p63 = scmp.ne.s32.totalorder %s54, %s55
      %p64 = scmp.eq.s32.totalorder %s23, 0
      %p65 = por %p63, %p64
      %p66 = scmp.ne.s32.totalorder %s54, %s55
      %p67 = scmp.eq.s32.totalorder %s24, 3
      %p68 = por %p66, %p67
      %p70 = scmp.ne.s32.totalorder %s55, %s69
      %p71 = scmp.eq.s32.totalorder %s24, 0
      %p72 = por %p70, %p71
      %s74 = sadd.s32 %s73, 1
      %p77 = scmp.eq.s32.totalorder %s18, 3
      %p78 = scmp.ne.s32.totalorder %s73, %s75
      %p79 = scmp.eq.s32.totalorder %s18, 0
      %p80 = por %p78, %p79
      %p81 = scmp.ne.s32.totalorder %s73, %s75
      %p82 = scmp.eq.s32.totalorder %s23, 3
      %p83 = por %p81, %p82
      %p84 = scmp.ne.s32.totalorder %s75, %s76
      %p85 = scmp.eq.s32.totalorder %s23, 0
      %p86 = por %p84, %p85
      %p87 = scmp.ne.s32.totalorder %s75, %s76
      %p88 = scmp.eq.s32.totalorder %s24, 3
      %p89 = por %p87, %p88
      %p91 = scmp.ne.s32.totalorder %s76, %s90
      %p92 = scmp.eq.s32.totalorder %s24, 0
      %p93 = por %p91, %p92
      %s95 = sadd.s32 %s94, 1
      %p98 = scmp.eq.s32.totalorder %s18, 3
      %p99 = scmp.ne.s32.totalorder %s94, %s96
      %p100 = scmp.eq.s32.totalorder %s18, 0
      %p101 = por %p99, %p100
      %p102 = scmp.ne.s32.totalorder %s94, %s96
      %p103 = scmp.eq.s32.totalorder %s23, 3
      %p104 = por %p102, %p103
      %p105 = scmp.ne.s32.totalorder %s96, %s97
      %p106 = scmp.eq.s32.totalorder %s23, 0
      %p107 = por %p105, %p106
      %p108 = scmp.ne.s32.totalorder %s96, %s97
      %p109 = scmp.eq.s32.totalorder %s24, 3
      %p110 = por %p108, %p109
      %p112 = scmp.ne.s32.totalorder %s97, %s111
      %p113 = scmp.eq.s32.totalorder %s24, 0
      %p114 = por %p112, %p113
      %s116 = sadd.s32 %s115, 1
      %p119 = scmp.eq.s32.totalorder %s18, 3
      %p120 = scmp.ne.s32.totalorder %s115, %s117
      %p121 = scmp.eq.s32.totalorder %s18, 0
      %p122 = por %p120, %p121
      %p123 = scmp.ne.s32.totalorder %s115, %s117
      %p124 = scmp.eq.s32.totalorder %s23, 3
      %p125 = por %p123, %p124
      %p126 = scmp.ne.s32.totalorder %s117, %s118
      %p127 = scmp.eq.s32.totalorder %s23, 0
      %p128 = por %p126, %p127
      %p129 = scmp.ne.s32.totalorder %s117, %s118
      %p130 = scmp.eq.s32.totalorder %s24, 3
      %p131 = por %p129, %p130
      %p133 = scmp.ne.s32.totalorder %s118, %s132
      %p134 = scmp.eq.s32.totalorder %s24, 0
      %p135 = por %p133, %p134
      %s136 = ssub.s32 %s18, %s25
      %p137 = scmp.eq.s32.totalorder %s136, 0
      %s139 = sadd.s32 %s138, 1
      %s140 = scalar_select %p137, %s138, %s139
      %p143 = pneg %p137
      %p144 = scmp.eq.s32.totalorder %s18, 3
      %p145 = por %p143, %p144
      %p146 = scmp.ne.s32.totalorder %s138, %s141
      %p147 = scmp.eq.s32.totalorder %s18, 0
      %p148 = por %p146, %p147
      %p149 = scmp.ne.s32.totalorder %s138, %s141
      %p150 = scmp.eq.s32.totalorder %s23, 3
      %p151 = por %p149, %p150
      %p152 = scmp.ne.s32.totalorder %s141, %s142
      %p153 = scmp.eq.s32.totalorder %s23, 0
      %p154 = por %p152, %p153
      %p155 = scmp.ne.s32.totalorder %s141, %s142
      %p156 = scmp.eq.s32.totalorder %s24, 3
      %p157 = por %p155, %p156
      %p159 = scmp.ne.s32.totalorder %s142, %s158
      %p160 = scmp.eq.s32.totalorder %s24, 0
      %p161 = por %p159, %p160
      %p162 = scmp.le.s32.totalorder 1, %s18
      %p163 = scmp.lt.s32.totalorder %s18, 5
      %p164 = pnand %p162, %p163
      %p165 = pneg %p164
      // Predicated region
      $region9: #{tpu_custom_call.1} parent=5 // pred_check
        _
      $region10: #{tpu_custom_call.1} parent=5 // pred_check_branch
        %167 = sbr.rel (%p164) target = $region12
      $region11: #{tpu_custom_call.1} parent=5 // pred_region
        %s168 = ssub.s32 %s18, 1
        // Predicated region
        $region13: #{tpu_custom_call.1} parent=11 // pred_check
          %p169 = pneg %p65
        $region14: #{tpu_custom_call.1} parent=11 // pred_check_branch
          %171 = sbr.rel (%p169) target = $region16
        $region15: #{tpu_custom_call.1} parent=11 // pred_region
          %s173 = ssub.s32 2048, 2048
          %174 = vsyncadd [#allocation6], %s173
          %s175 = sshll.u32 [#allocation5], 4
          %s176 = int_to_ptr.vmem [resolvable:$true] %s175
          %181 = dma.hbm_to_vmem [thread:$0]  %s1, 2048, %s176, [#allocation6], 128, 128, 8
        $region16: #{tpu_custom_call.1} parent=11 // pred_fallthru
          _
        // Predicated region
        $region17: #{tpu_custom_call.1} parent=11 // pred_check
          %p182 = pneg %p86
        $region18: #{tpu_custom_call.1} parent=11 // pred_check_branch
          %184 = sbr.rel (%p182) target = $region20
        $region19: #{tpu_custom_call.1} parent=11 // pred_region
          _
        $region20: #{tpu_custom_call.1} parent=11 // pred_fallthru
          _
        // Predicated region
        $region21: #{tpu_custom_call.1} parent=11 // pred_check
          %p185 = pneg %p107
        $region22: #{tpu_custom_call.1} parent=11 // pred_check_branch
          %187 = sbr.rel (%p185) target = $region24
        $region23: #{tpu_custom_call.1} parent=11 // pred_region
          %s189 = ssub.s32 2048, 2048
          %190 = vsyncadd [#allocation6], %s189
          %s191 = sshll.u32 [#allocation7], 4
          %s192 = int_to_ptr.vmem [resolvable:$true] %s191
          %197 = dma.hbm_to_vmem [thread:$0]  %s3, 2048, %s192, [#allocation6], 64, 64, 4
        $region24: #{tpu_custom_call.1} parent=11 // pred_fallthru
          _
        // Predicated region
        $region25: #{tpu_custom_call.1} parent=11 // pred_check
          %p198 = pneg %p128
        $region26: #{tpu_custom_call.1} parent=11 // pred_check_branch
          %200 = sbr.rel (%p198) target = $region28
        $region27: #{tpu_custom_call.1} parent=11 // pred_region
          _
        $region28: #{tpu_custom_call.1} parent=11 // pred_fallthru
          _
      $region12: #{tpu_custom_call.1} parent=5 // pred_fallthru
        _
      %p201 = scmp.lt.s32.totalorder %s18, 4
      // Predicated region
      $region29: #{tpu_custom_call.1} parent=5 // pred_check
        %p202 = pneg %p201
      $region30: #{tpu_custom_call.1} parent=5 // pred_check_branch
        %204 = sbr.rel (%p202) target = $region32
      $region31: #{tpu_custom_call.1} parent=5 // pred_region
        // Predicated region
        $region33: #{tpu_custom_call.1} parent=31 // pred_check
          %p205 = pneg %p38
        $region34: #{tpu_custom_call.1} parent=31 // pred_check_branch
          %207 = sbr.rel (%p205) target = $region36
        $region35: #{tpu_custom_call.1} parent=31 // pred_region
          %s208 = sand.u32 %s28, 1
          %s209 = scalar_lea.sflag [#allocation3], %s208
          %s210 = sand.u32 %s28, 1
          %s211 = smul.addr %s210, 16
          %s212 = scalar_lea.vmem [#allocation2], %s211
          %s213 = smul.u32 2, %s18
          %s215 = ssub.s32 256, 256
          %216 = vsyncadd %s209, %s215
          %s217 = smul.addr %s213, 128
          %s218 = scalar_lea.hbm %s0, %s217
          %s219 = sshll.u32 %s212, 4
          %s220 = int_to_ptr.vmem [resolvable:$true] %s219
          %225 = dma.hbm_to_vmem [thread:$0]  %s218, 256, %s220, %s209, 128, 128, 8
        $region36: #{tpu_custom_call.1} parent=31 // pred_fallthru
          _
      $region32: #{tpu_custom_call.1} parent=5 // pred_fallthru
        _
      %p226 = scmp.le.s32.totalorder 1, %s18
      %p227 = scmp.lt.s32.totalorder %s18, 5
      %p228 = pnand %p226, %p227
      %p229 = pneg %p228
      // Predicated region
      $region37: #{tpu_custom_call.1} parent=5 // pred_check
        _
      $region38: #{tpu_custom_call.1} parent=5 // pred_check_branch
        %231 = sbr.rel (%p228) target = $region40
      $region39: #{tpu_custom_call.1} parent=5 // pred_region
        %s232 = ssub.s32 %s18, 1
        %s233 = sand.u32 %s31, 1
        %s234 = scalar_lea.sflag [#allocation3], %s233
        %s235 = sand.u32 %s31, 1
        %s236 = smul.addr %s235, 16
        %s237 = scalar_lea.vmem [#allocation2], %s236
        // Predicated region
        $region41: #{tpu_custom_call.1} parent=39 // pred_check
          %p238 = pneg %p44
        $region42: #{tpu_custom_call.1} parent=39 // pred_check_branch
          %240 = sbr.rel (%p238) target = $region44
        $region43: #{tpu_custom_call.1} parent=39 // pred_region
          %241 = dma.done %s234, 256
        $region44: #{tpu_custom_call.1} parent=39 // pred_fallthru
          _
        // Predicated region
        $region45: #{tpu_custom_call.1} parent=39 // pred_check
          %p242 = pneg %p65
        $region46: #{tpu_custom_call.1} parent=39 // pred_check_branch
          %244 = sbr.rel (%p242) target = $region48
        $region47: #{tpu_custom_call.1} parent=39 // pred_region
          %245 = dma.done [#allocation6], 2048
        $region48: #{tpu_custom_call.1} parent=39 // pred_fallthru
          _
        // Predicated region
        $region49: #{tpu_custom_call.1} parent=39 // pred_check
          %p246 = pneg %p107
        $region50: #{tpu_custom_call.1} parent=39 // pred_check_branch
          %248 = sbr.rel (%p246) target = $region52
        $region51: #{tpu_custom_call.1} parent=39 // pred_region
          %249 = dma.done [#allocation6], 2048
        $region52: #{tpu_custom_call.1} parent=39 // pred_fallthru
          _
        %s250 = sand.u32 %s31, 1
        %s251 = scalar_lea.sflag [#allocation3], %s250
        %s252 = sand.u32 %s31, 1
        %s253 = smul.addr %s252, 16
        %s254 = scalar_lea.vmem [#allocation2], %s253
        %p255 = pneg %p44
        %p256 = pneg %p41
        %p257 = pneg %p65
        %p258 = pneg %p62
        %p259 = pneg %p86
        %p260 = pneg %p83
        %p261 = pneg %p107
        %p262 = pneg %p104
        %p263 = pneg %p128
        %p264 = pneg %p125
        %p265 = pneg %p154
        %p266 = pneg %p151
        %s267 = sand.u32 %s141, 1
        %s268 = scalar_lea.sflag [#allocation4], %s267
        %s269 = sand.u32 %s141, 1
        %s270 = smul.addr %s269, 16
        %s271 = scalar_lea.vmem [#allocation8], %s270
        %s272 = smul.u32 2, %s23
        %s273 = smul.u32 2, %s23
        %v275 = vld [vmem:[%s237] sm:$0xff]
        %v276 = vld [vmem:[%s237 + $0x8] sm:$0xff]
        %v277 = vld [vmem:[#allocation5] sm:$0xff]
        %v278 = vld [vmem:[#allocation5 + $0x8] sm:$0xff]
        %v279 = vld [vmem:[#allocation5 + $0x10] sm:$0xff]
        %v280 = vld [vmem:[#allocation5 + $0x18] sm:$0xff]
        %v281 = vld [vmem:[#allocation5 + $0x20] sm:$0xff]
        %v282 = vld [vmem:[#allocation5 + $0x28] sm:$0xff]
        %v283 = vld [vmem:[#allocation5 + $0x30] sm:$0xff]
        %v284 = vld [vmem:[#allocation5 + $0x38] sm:$0xff]
        %v285 = vld [vmem:[#allocation5 + $0x40] sm:$0xff]
        %v286 = vld [vmem:[#allocation5 + $0x48] sm:$0xff]
        %v287 = vld [vmem:[#allocation5 + $0x50] sm:$0xff]
        %v288 = vld [vmem:[#allocation5 + $0x58] sm:$0xff]
        %v289 = vld [vmem:[#allocation5 + $0x60] sm:$0xff]
        %v290 = vld [vmem:[#allocation5 + $0x68] sm:$0xff]
        %v291 = vld [vmem:[#allocation5 + $0x70] sm:$0xff]
        %v292 = vld [vmem:[#allocation5 + $0x78] sm:$0xff]
        %v293 = vld [vmem:[#allocation7] sm:$0xf]
        %v294 = vld [vmem:[#allocation7 + $0x4] sm:$0xf]
        %v295 = vld [vmem:[#allocation7 + $0x8] sm:$0xf]
        %v296 = vld [vmem:[#allocation7 + $0xc] sm:$0xf]
        %v297 = vld [vmem:[#allocation7 + $0x10] sm:$0xf]
        %v298 = vld [vmem:[#allocation7 + $0x14] sm:$0xf]
        %v299 = vld [vmem:[#allocation7 + $0x18] sm:$0xf]
        %v300 = vld [vmem:[#allocation7 + $0x1c] sm:$0xf]
        %v301 = vld [vmem:[#allocation7 + $0x20] sm:$0xf]
        %v302 = vld [vmem:[#allocation7 + $0x24] sm:$0xf]
        %v303 = vld [vmem:[#allocation7 + $0x28] sm:$0xf]
        %v304 = vld [vmem:[#allocation7 + $0x2c] sm:$0xf]
        %v305 = vld [vmem:[#allocation7 + $0x30] sm:$0xf]
        %v306 = vld [vmem:[#allocation7 + $0x34] sm:$0xf]
        %v307 = vld [vmem:[#allocation7 + $0x38] sm:$0xf]
        %v308 = vld [vmem:[#allocation7 + $0x3c] sm:$0xf]
        %v309 = vld [vmem:[#allocation7 + $0x40] sm:$0xf]
        %v310 = vld [vmem:[#allocation7 + $0x44] sm:$0xf]
        %v311 = vld [vmem:[#allocation7 + $0x48] sm:$0xf]
        %v312 = vld [vmem:[#allocation7 + $0x4c] sm:$0xf]
        %v313 = vld [vmem:[#allocation7 + $0x50] sm:$0xf]
        %v314 = vld [vmem:[#allocation7 + $0x54] sm:$0xf]
        %v315 = vld [vmem:[#allocation7 + $0x58] sm:$0xf]
        %v316 = vld [vmem:[#allocation7 + $0x5c] sm:$0xf]
        %v317 = vld [vmem:[#allocation7 + $0x60] sm:$0xf]
        %v318 = vld [vmem:[#allocation7 + $0x64] sm:$0xf]
        %v319 = vld [vmem:[#allocation7 + $0x68] sm:$0xf]
        %v320 = vld [vmem:[#allocation7 + $0x6c] sm:$0xf]
        %v321 = vld [vmem:[#allocation7 + $0x70] sm:$0xf]
        %v322 = vld [vmem:[#allocation7 + $0x74] sm:$0xf]
        %v323 = vld [vmem:[#allocation7 + $0x78] sm:$0xf]
        %v324 = vld [vmem:[#allocation7 + $0x7c] sm:$0xf]
        %v325 = vld [vmem:[%s2] sm:$0x3]
        %v326 = vld [vmem:[%s4] sm:$0x1]
        %v327 = vpack.c.bf16 %v276, %v275
        %v329 = vlaneseq
        %v330 = vshrl.u32 %v329, 7
        %v331 = vsub.s32 0, %v330
        %v332 = vrot.slane %v325, %v331
        %v333 = vlaneseq
        %v334 = vshrl.u32 %v333, 7
        %v335 = vsub.s32 1, %v334
        %v336 = vrot.slane %v325, %v335
        %v355 = vunpack.c.l.b16 %v277
        %v356 = vunpack.c.h.b16 %v277
        %v357 = vunpack.c.l.b16 %v278
        %v358 = vunpack.c.h.b16 %v278
        %v359 = vunpack.c.l.b16 %v279
        %v360 = vunpack.c.h.b16 %v279
        %v361 = vunpack.c.l.b16 %v280
        %v362 = vunpack.c.h.b16 %v280
        %v363 = vunpack.c.l.b16 %v281
        %v364 = vunpack.c.h.b16 %v281
        %v365 = vunpack.c.l.b16 %v282
        %v366 = vunpack.c.h.b16 %v282
        %v367 = vunpack.c.l.b16 %v283
        %v368 = vunpack.c.h.b16 %v283
        %v369 = vunpack.c.l.b16 %v284
        %v370 = vunpack.c.h.b16 %v284
        %v371 = vunpack.c.l.b16 %v285
        %v372 = vunpack.c.h.b16 %v285
        %v373 = vunpack.c.l.b16 %v286
        %v374 = vunpack.c.h.b16 %v286
        %v375 = vunpack.c.l.b16 %v287
        %v376 = vunpack.c.h.b16 %v287
        %v377 = vunpack.c.l.b16 %v288
        %v378 = vunpack.c.h.b16 %v288
        %v379 = vunpack.c.l.b16 %v289
        %v380 = vunpack.c.h.b16 %v289
        %v381 = vunpack.c.l.b16 %v290
        %v382 = vunpack.c.h.b16 %v290
        %v383 = vunpack.c.l.b16 %v291
        %v384 = vunpack.c.h.b16 %v291
        %v385 = vunpack.c.l.b16 %v292
        %v386 = vunpack.c.h.b16 %v292
        %v387 = vpack.c.b16 %v357, %v355
        %v388 = vpack.c.b16 %v358, %v356
        %v389 = vpack.c.b16 %v361, %v359
        %v390 = vpack.c.b16 %v362, %v360
        %v391 = vpack.c.b16 %v365, %v363
        %v392 = vpack.c.b16 %v366, %v364
        %v393 = vpack.c.b16 %v369, %v367
        %v394 = vpack.c.b16 %v370, %v368
        %v395 = vpack.c.b16 %v373, %v371
        %v396 = vpack.c.b16 %v374, %v372
        %v397 = vpack.c.b16 %v377, %v375
        %v398 = vpack.c.b16 %v378, %v376
        %v399 = vpack.c.b16 %v381, %v379
        %v400 = vpack.c.b16 %v382, %v380
        %v401 = vpack.c.b16 %v385, %v383
        %v402 = vpack.c.b16 %v386, %v384
        %419 = vmatprep.subr.bf16.mxu0 %v388
        %420 = vmatpush1.bf16.msra.mxu0 %v387
        %421 = vmatprep.subr.bf16.mxu0 %v390
        %422 = vmatpush1.bf16.msra.mxu0 %v389
        %423 = vmatprep.subr.bf16.mxu0 %v392
        %424 = vmatpush1.bf16.msra.mxu0 %v391
        %425 = vmatprep.subr.bf16.mxu0 %v394
        %426 = vmatpush1.bf16.msra.mxu0 %v393
        %427 = vmatprep.subr.bf16.mxu0 %v396
        %428 = vmatpush1.bf16.msra.mxu0 %v395
        %429 = vmatprep.subr.bf16.mxu0 %v398
        %430 = vmatpush1.bf16.msra.mxu0 %v397
        %431 = vmatprep.subr.bf16.mxu0 %v400
        %432 = vmatpush1.bf16.msra.mxu0 %v399
        %433 = vmatprep.subr.bf16.mxu0 %v402
        %434 = vmatpush1.bf16.msra.mxu0 %v401
        %435 = vmatprep.subr.bf16.mxu0 0
        %436 = vmatpush1.bf16.msra.mxu0 0
        %437 = vmatprep.subr.bf16.mxu0 0
        %438 = vmatpush1.bf16.msra.mxu0 0
        %439 = vmatprep.subr.bf16.mxu0 0
        %440 = vmatpush1.bf16.msra.mxu0 0
        %441 = vmatprep.subr.bf16.mxu0 0
        %442 = vmatpush1.bf16.msra.mxu0 0
        %443 = vmatprep.subr.bf16.mxu0 0
        %444 = vmatpush1.bf16.msra.mxu0 0
        %445 = vmatprep.subr.bf16.mxu0 0
        %446 = vmatpush1.bf16.msra.mxu0 0
        %447 = vmatprep.subr.bf16.mxu0 0
        %448 = vmatpush1.bf16.msra.mxu0 0
        %449 = vmatprep.subr.bf16.mxu0 0
        %450 = vmatpush1.bf16.msra.mxu0 0
        %451 = vmatprep.mubr.bf16.mxu0 0
        %452 = vmatmul.mubr.bf16.gmra.mrb[0].mxu0 %v327
        %v453 = vpop.f32.mrb[0].mxu0
        %v454 = vadd.f32 %v332, %v453
        %v455 = vpop.f32.mrb[0].mxu0
        %v456 = vadd.f32 %v336, %v455
        %v457 = vpop.f32.mrb[0].mxu0
        %v458 = vadd.f32 %v332, %v457
        %v459 = vpop.f32.mrb[0].mxu0
        %v460 = vadd.f32 %v336, %v459
        %461 = vdwg.mxu0
        %v462 = vmax.f32 %v454, 0.0
        %v463 = vmax.f32 %v456, 0.0
        %v464 = vmax.f32 %v458, 0.0
        %v465 = vmax.f32 %v460, 0.0
        %v466 = vpack.c.bf16 %v464, %v462
        %v467 = vpack.c.bf16 %v465, %v463
        %v469 = vlaneseq
        %v470 = vshrl.u32 %v469, 7
        %v471 = vsub.s32 0, %v470
        %v472 = vrot.slane %v326, %v471
        %v506 = vunpack.c.l.b16 %v293
        %v507 = vunpack.c.l.b16 %v294
        %v508 = vunpack.c.l.b16 %v295
        %v509 = vunpack.c.l.b16 %v296
        %v510 = vunpack.c.l.b16 %v297
        %v511 = vunpack.c.l.b16 %v298
        %v512 = vunpack.c.l.b16 %v299
        %v513 = vunpack.c.l.b16 %v300
        %v514 = vunpack.c.l.b16 %v301
        %v515 = vunpack.c.l.b16 %v302
        %v516 = vunpack.c.l.b16 %v303
        %v517 = vunpack.c.l.b16 %v304
        %v518 = vunpack.c.l.b16 %v305
        %v519 = vunpack.c.l.b16 %v306
        %v520 = vunpack.c.l.b16 %v307
        %v521 = vunpack.c.l.b16 %v308
        %v522 = vunpack.c.l.b16 %v309
        %v523 = vunpack.c.l.b16 %v310
        %v524 = vunpack.c.l.b16 %v311
        %v525 = vunpack.c.l.b16 %v312
        %v526 = vunpack.c.l.b16 %v313
        %v527 = vunpack.c.l.b16 %v314
        %v528 = vunpack.c.l.b16 %v315
        %v529 = vunpack.c.l.b16 %v316
        %v530 = vunpack.c.l.b16 %v317
        %v531 = vunpack.c.l.b16 %v318
        %v532 = vunpack.c.l.b16 %v319
        %v533 = vunpack.c.l.b16 %v320
        %v534 = vunpack.c.l.b16 %v321
        %v535 = vunpack.c.l.b16 %v322
        %v536 = vunpack.c.l.b16 %v323
        %v537 = vunpack.c.l.b16 %v324
        %v538 = vpack.c.b16 %v507, %v506
        %v539 = vpack.c.b16 %v509, %v508
        %v540 = vpack.c.b16 %v511, %v510
        %v541 = vpack.c.b16 %v513, %v512
        %v542 = vpack.c.b16 %v515, %v514
        %v543 = vpack.c.b16 %v517, %v516
        %v544 = vpack.c.b16 %v519, %v518
        %v545 = vpack.c.b16 %v521, %v520
        %v546 = vpack.c.b16 %v523, %v522
        %v547 = vpack.c.b16 %v525, %v524
        %v548 = vpack.c.b16 %v527, %v526
        %v549 = vpack.c.b16 %v529, %v528
        %v550 = vpack.c.b16 %v531, %v530
        %v551 = vpack.c.b16 %v533, %v532
        %v552 = vpack.c.b16 %v535, %v534
        %v553 = vpack.c.b16 %v537, %v536
        %570 = vmatprep.subr.bf16.mxu0 0
        %571 = vmatpush1.bf16.msra.mxu0 %v538
        %572 = vmatprep.subr.bf16.mxu0 0
        %573 = vmatpush1.bf16.msra.mxu0 %v539
        %574 = vmatprep.subr.bf16.mxu0 0
        %575 = vmatpush1.bf16.msra.mxu0 %v540
        %576 = vmatprep.subr.bf16.mxu0 0
        %577 = vmatpush1.bf16.msra.mxu0 %v541
        %578 = vmatprep.subr.bf16.mxu0 0
        %579 = vmatpush1.bf16.msra.mxu0 %v542
        %580 = vmatprep.subr.bf16.mxu0 0
        %581 = vmatpush1.bf16.msra.mxu0 %v543
        %582 = vmatprep.subr.bf16.mxu0 0
        %583 = vmatpush1.bf16.msra.mxu0 %v544
        %584 = vmatprep.subr.bf16.mxu0 0
        %585 = vmatpush1.bf16.msra.mxu0 %v545
        %586 = vmatprep.subr.bf16.mxu0 0
        %587 = vmatpush1.bf16.msra.mxu0 %v546
        %588 = vmatprep.subr.bf16.mxu0 0
        %589 = vmatpush1.bf16.msra.mxu0 %v547
        %590 = vmatprep.subr.bf16.mxu0 0
        %591 = vmatpush1.bf16.msra.mxu0 %v548
        %592 = vmatprep.subr.bf16.mxu0 0
        %593 = vmatpush1.bf16.msra.mxu0 %v549
        %594 = vmatprep.subr.bf16.mxu0 0
        %595 = vmatpush1.bf16.msra.mxu0 %v550
        %596 = vmatprep.subr.bf16.mxu0 0
        %597 = vmatpush1.bf16.msra.mxu0 %v551
        %598 = vmatprep.subr.bf16.mxu0 0
        %599 = vmatpush1.bf16.msra.mxu0 %v552
        %600 = vmatprep.subr.bf16.mxu0 0
        %601 = vmatpush1.bf16.msra.mxu0 %v553
        %602 = vmatprep.mubr.bf16.mxu0 %v467
        %603 = vmatmul.mubr.bf16.gmra.mrb[0].mxu0 %v466
        %v604 = vpop.f32.mrb[0].mxu0
        %v605 = vadd.f32 %v472, %v604
        %v606 = vpop.f32.mrb[0].mxu0
        %v607 = vpop.f32.mrb[0].mxu0
        %v608 = vadd.f32 %v472, %v607
        %v609 = vpop.f32.mrb[0].mxu0
        %610 = vdwg.mxu0
        %v611 = vadd.f32 %v605, %v275
        %v612 = vadd.f32 %v608, %v276
        %613 = vst [vmem:[%s271] sm:$0xff] %v611
        %614 = vst [vmem:[%s271 + $0x8] sm:$0xff] %v612
        %s615 = sand.u32 %s141, 1
        %s616 = scalar_lea.sflag [#allocation4], %s615
        %s617 = sand.u32 %s141, 1
        %s618 = smul.addr %s617, 16
        %s619 = scalar_lea.vmem [#allocation8], %s618
        // Predicated region
        $region53: #{tpu_custom_call.1} parent=39 // pred_check
          %p620 = pneg %p151
        $region54: #{tpu_custom_call.1} parent=39 // pred_check_branch
          %622 = sbr.rel (%p620) target = $region56
        $region55: #{tpu_custom_call.1} parent=39 // pred_region
          %s623 = smul.u32 2, %s23
          %s625 = ssub.s32 256, 256
          %626 = vsyncadd %s616, %s625
          %s627 = smul.addr %s623, 128
          %s628 = scalar_lea.hbm %s5, %s627
          %s629 = sshll.u32 %s619, 4
          %s630 = int_to_ptr.vmem [resolvable:$true] %s629
          %635 = dma.vmem_to_hbm [thread:$0]  %s630, 256, %s628, %s616, 128, 128, 8
        $region56: #{tpu_custom_call.1} parent=39 // pred_fallthru
          _
      $region40: #{tpu_custom_call.1} parent=5 // pred_fallthru
        _
      %p636 = scmp.le.s32.totalorder 2, %s18
      // Predicated region
      $region57: #{tpu_custom_call.1} parent=5 // pred_check
        %p637 = pneg %p636
      $region58: #{tpu_custom_call.1} parent=5 // pred_check_branch
        %639 = sbr.rel (%p637) target = $region60
      $region59: #{tpu_custom_call.1} parent=5 // pred_region
        %s640 = ssub.s32 %s18, 2
        // Predicated region
        $region61: #{tpu_custom_call.1} parent=59 // pred_check
          %p641 = pneg %p157
        $region62: #{tpu_custom_call.1} parent=59 // pred_check_branch
          %643 = sbr.rel (%p641) target = $region64
        $region63: #{tpu_custom_call.1} parent=59 // pred_region
          %s644 = sand.u32 %s142, 1
          %s645 = scalar_lea.sflag [#allocation4], %s644
          %s646 = sand.u32 %s142, 1
          %s647 = smul.addr %s646, 16
          %s648 = scalar_lea.vmem [#allocation8], %s647
          %649 = dma.done %s645, 256
        $region64: #{tpu_custom_call.1} parent=59 // pred_fallthru
          _
      $region60: #{tpu_custom_call.1} parent=5 // pred_fallthru
        _
    $region6: #{tpu_custom_call.1} parent=1 // loop_footer
      %s22 = sadd.s32 1, %s18
    $region7: #{tpu_custom_call.1} parent=1 // loop_footer_branch
      %17 = sbr.rel target = $region3
    $region8: #{tpu_custom_call.1} parent=1 // loop_exit
      _
    %650 = vsyncpa [#allocation3], 1
    %s651 = scalar_lea.sflag [#allocation3], 1
    %652 = vsyncpa %s651, 1
    %653 = vsyncpa [#allocation6], 1
    %654 = vsyncpa [#allocation4], 1
    %s655 = scalar_lea.sflag [#allocation4], 1
    %656 = vsyncpa %s655, 1

</llo_original>
